<compile_context>
chip_gen: v5e
topology: v5e:2x2
jax: 0.10.0
libtpu: 0.0.40
codegen_flags: <defaults>
</compile_context>

<pallas_src>
import math
from functools import partial

import jax
import jax.numpy as jnp
from jax.experimental import pallas as pl
from jax.experimental.pallas import tpu as pltpu


LOG_2PI = math.log(2.0 * math.pi)

# Scoped-VMEM budget used both for tile sizing and as the explicit compiler
# limit.  32 MiB is safe on every generation (v5e/v6e: 128 MiB physical,
# v7x: 64 MiB physical) and above v5e's 16 MiB scoped default.
_VMEM_BUDGET_BYTES = 32 * 1024 * 1024


def _round_up(n, m):
    return ((n + m - 1) // m) * m


def _choose_tk(D, tb, L, mxu_itemsize, budget_bytes, cap=8192):
    """Largest K tile (multiple of 128, <= cap) whose double-buffered working
    set fits the VMEM budget."""
    tk = min(_round_up(D, 128), cap)

    def fits(t):
        streamed = 2 * (tb * t + t * 2 * L) * mxu_itemsize      # x + W, 2 buffers
        fixed = ((tb * 2 * L) * 4                               # f32 accumulator
                 + 2 * (tb * 4 * L) * 4                         # fused output
                 + 2 * (tb * L) * 4                             # eps
                 + 2 * (2 * L) * 4)                             # bias
        return streamed + fixed <= budget_bytes

    while tk > 128 and not fits(tk):
        tk -= 128
    return tk


def _gaussian_head(mu_logvar, eps_ref, out_ref):
    """Reparameterized sample + KL / log-prob epilogue (all f32, VPU/EUP only).

    mu_logvar : (tb, 2L) f32 value (linear output, bias already added)
    eps_ref   : (tb, L)  standard-normal noise for rsample()
    out_ref   : (tb, 4L) lane-dense fused output [z | kl | log_q | log_p]
    """
    L = out_ref.shape[-1] // 4
    mu = mu_logvar[:, :L]          # mid-lane slice, once, in the idle epilogue
    logvar = mu_logvar[:, L:]

    std = jnp.exp(0.5 * logvar)    # only transcendental (EUP)
    eps = eps_ref[...]
    z = mu + std * eps

    # log q(z|x) = -(z-mu)^2/(2 var) - log(std) - 0.5*log(2*pi)
    #   with z-mu = std*eps and log(std) = 0.5*logvar (no log, no divide).
    log_q = -0.5 * (eps * eps) - 0.5 * logvar - 0.5 * LOG_2PI
    # log p(z) under the standard-normal prior.
    log_p = -0.5 * (z * z) - 0.5 * LOG_2PI
    # KL( N(mu, std) || N(0, 1) ) = -0.5*logvar + 0.5*(var + mu^2) - 0.5
    var = std * std
    kl = -0.5 * logvar + 0.5 * (var + mu * mu) - 0.5

    # One lane-dense fused store; split back into four outputs in JAX.
    out_ref[...] = jnp.concatenate([z, kl, log_q, log_p],
                                   axis=-1).astype(out_ref.dtype)


def _kernel_single(x_ref, w_ref, b_ref, eps_ref, out_ref):
    """Single-K-tile variant: one MXU pass, no scratch, no K grid axis."""
    acc = jnp.dot(x_ref[...], w_ref[...], preferred_element_type=jnp.float32)
    _gaussian_head(acc + b_ref[...], eps_ref, out_ref)


def _kernel_ktiled(x_ref, w_ref, b_ref, eps_ref, out_ref, acc_ref):
    """K-tiled variant with an f32 VMEM accumulator (large D)."""
    k = pl.program_id(1)

    @pl.when(k == 0)
    def _init():
        acc_ref[...] = jnp.zeros_like(acc_ref)

    acc_ref[...] += jnp.dot(x_ref[...], w_ref[...],
                            preferred_element_type=jnp.float32)

    @pl.when(k == pl.num_programs(1) - 1)
    def _finalize():
        _gaussian_head(acc_ref[...] + b_ref[...], eps_ref, out_ref)


@partial(jax.jit, static_argnames=("latent_dim", "mxu_dtype"))
def gaussian_encoder_forward(x, W, b, eps, latent_dim, mxu_dtype=jnp.float32):
    """x: (B, C, H, W) f32 -> (z, kl, log_q_z, log_p_z), each (B, latent_dim).

    W: (D, 2L) packed weight, b: (1, 2L) packed bias, eps: (B, L) rsample noise.
    mxu_dtype: dtype of the MXU inputs (bf16 halves weight HBM traffic);
    the accumulator and the whole epilogue stay f32 on all chips.
    """
    B = x.shape[0]
    L = latent_dim
    x_flat = x.reshape(B, -1).astype(jnp.float32)
    D = x_flat.shape[1]

    # Batch tile: one tile if the batch fits the MXU height, else 256-row tiles.
    if B <= 256:
        tb = _round_up(max(B, 1), 8)
        B_pad = tb
    else:
        tb = 256
        B_pad = _round_up(B, tb)

    mxu_itemsize = jnp.dtype(mxu_dtype).itemsize
    tk = _choose_tk(D, tb, L, mxu_itemsize, _VMEM_BUDGET_BYTES)
    D_pad = _round_up(D, tk)
    kt = D_pad // tk

    # Zero-pad batch (sublane multiple) and contraction dim (tile multiple).
    if B_pad != B or D_pad != D:
        x_flat = jnp.pad(x_flat, ((0, B_pad - B), (0, D_pad - D)))
    eps = jnp.asarray(eps, jnp.float32)
    if B_pad != B:
        eps = jnp.pad(eps, ((0, B_pad - B), (0, 0)))

    W_p = jnp.asarray(W, jnp.float32)
    if D_pad != D:
        W_p = jnp.pad(W_p, ((0, D_pad - D), (0, 0)))
    b2 = jnp.asarray(b, jnp.float32).reshape(1, 2 * L)

    x_in = x_flat.astype(mxu_dtype)
    W_in = W_p.astype(mxu_dtype)

    cp = pltpu.CompilerParams(
        dimension_semantics=("parallel",) if kt == 1 else ("parallel", "arbitrary"),
        vmem_limit_bytes=_VMEM_BUDGET_BYTES)

    if kt == 1:
        fused = pl.pallas_call(
            _kernel_single,
            out_shape=jax.ShapeDtypeStruct((B_pad, 4 * L), jnp.float32),
            grid=(B_pad // tb,),
            in_specs=[
                pl.BlockSpec((tb, D_pad), lambda i: (i, 0)),       # x
                pl.BlockSpec((D_pad, 2 * L), lambda i: (0, 0)),    # W (packed)
                pl.BlockSpec((1, 2 * L), lambda i: (0, 0)),        # bias (packed)
                pl.BlockSpec((tb, L), lambda i: (i, 0)),           # eps
            ],
            out_specs=pl.BlockSpec((tb, 4 * L), lambda i: (i, 0)),
            compiler_params=cp,
        )(x_in, W_in, b2, eps)
    else:
        fused = pl.pallas_call(
            _kernel_ktiled,
            out_shape=jax.ShapeDtypeStruct((B_pad, 4 * L), jnp.float32),
            grid=(B_pad // tb, kt),
            in_specs=[
                pl.BlockSpec((tb, tk), lambda i, k: (i, k)),       # x
                pl.BlockSpec((tk, 2 * L), lambda i, k: (k, 0)),    # W (packed)
                pl.BlockSpec((1, 2 * L), lambda i, k: (0, 0)),     # bias (packed)
                pl.BlockSpec((tb, L), lambda i, k: (i, 0)),        # eps
            ],
            out_specs=pl.BlockSpec((tb, 4 * L), lambda i, k: (i, 0)),
            scratch_shapes=[pltpu.VMEM((tb, 2 * L), jnp.float32)],
            compiler_params=cp,
        )(x_in, W_in, b2, eps)

    # Split the fused lane-dense output back into the four module outputs.
    z = fused[:B, 0 * L:1 * L]
    kl = fused[:B, 1 * L:2 * L]
    log_q = fused[:B, 2 * L:3 * L]
    log_p = fused[:B, 3 * L:4 * L]
    return z, kl, log_q, log_p


def _reference(x, W, b, eps, latent_dim):
    """Pure-JAX reference matching the PyTorch semantics (given the same eps)."""
    B = x.shape[0]
    mu_logvar = x.reshape(B, -1) @ W + b.reshape(1, -1)
    mu = mu_logvar[:, :latent_dim]
    logvar = mu_logvar[:, latent_dim:]
    std = jnp.exp(logvar / 2.0)
    z = mu + std * eps
    log_q = -((z - mu) ** 2) / (2.0 * std * std) - jnp.log(std) - 0.5 * LOG_2PI
    log_p = -0.5 * z * z - 0.5 * LOG_2PI
    kl = -jnp.log(std) + 0.5 * (std * std + mu * mu) - 0.5
    return z, kl, log_q, log_p


if __name__ == "__main__":
    # Small deterministic setup: batch=2, channels=4, spatial=16, latent_dim=32.
    B, C, H, Wd = 2, 4, 16, 16
    latent_dim = 32
    D = C * H * Wd

    key = jax.random.PRNGKey(0)
    kx, kw, kb, ke = jax.random.split(key, 4)

    x = jax.random.normal(kx, (B, C, H, Wd), dtype=jnp.float32)
    W = jax.random.normal(kw, (D, 2 * latent_dim), dtype=jnp.float32) * 0.02
    b = jax.random.normal(kb, (1, 2 * latent_dim), dtype=jnp.float32) * 0.01
    eps = jax.random.normal(ke, (B, latent_dim), dtype=jnp.float32)  # rsample noise

    refs = _reference(x, W, b, eps, latent_dim)

    # Exact-parity check with f32 MXU inputs.
    outs = gaussian_encoder_forward(x, W, b, eps, latent_dim=latent_dim,
                                    mxu_dtype=jnp.float32)
    outs = jax.block_until_ready(outs)
    for o, r in zip(outs, refs):
        assert o.shape == (B, latent_dim)
        assert jnp.allclose(o, r, atol=1e-5, rtol=1e-5), "f32 mismatch vs reference"

    # bf16 MXU-input path (halves weight HBM traffic); f32 accumulator/epilogue.
    outs_bf16 = gaussian_encoder_forward(x, W, b, eps, latent_dim=latent_dim,
                                         mxu_dtype=jnp.bfloat16)
    outs_bf16 = jax.block_until_ready(outs_bf16)
    for o, r in zip(outs_bf16, refs):
        assert o.shape == (B, latent_dim)
        assert jnp.allclose(o, r, atol=1e-1, rtol=1e-1), "bf16 mismatch vs reference"

    print("KERNEL_OK")
</pallas_src>

<mosaic_0001>
module attributes {stable_mosaic.version = 11 : i64} {
  func.func @_kernel_single(%arg0: i32, %arg1: memref<8x1024xf32, #tpu.memory_space<vmem>>, %arg2: memref<1024x64xf32, #tpu.memory_space<vmem>>, %arg3: memref<1x64xf32, #tpu.memory_space<vmem>>, %arg4: memref<8x32xf32, #tpu.memory_space<vmem>>, %arg5: memref<8x128xf32, #tpu.memory_space<vmem>>) attributes {dimension_semantics = [#tpu.dimension_semantics<parallel>], iteration_bounds = array<i64: 1>, scalar_prefetch = 0 : i64, scratch_operands = 0 : i64, tpu.core_type = #tpu.core_type<tc>, window_params = [{transform_indices = @transform_0, window_bounds = array<i64: 8, 1024>}, {pipeline_mode = #tpu.pipeline_mode<synchronous>, transform_indices = @transform_1, window_bounds = array<i64: 1024, 64>}, {pipeline_mode = #tpu.pipeline_mode<synchronous>, transform_indices = @transform_2, window_bounds = array<i64: 1, 64>}, {transform_indices = @transform_3, window_bounds = array<i64: 8, 32>}, {transform_indices = @transform_4, window_bounds = array<i64: 8, 128>}]} {
    %c0 = arith.constant 0 : index
    %c0_0 = arith.constant 0 : index
    %0 = vector.load %arg1[%c0, %c0_0] : memref<8x1024xf32, #tpu.memory_space<vmem>>, vector<8x1024xf32>
    %c0_1 = arith.constant 0 : index
    %c0_2 = arith.constant 0 : index
    %1 = vector.load %arg2[%c0_1, %c0_2] : memref<1024x64xf32, #tpu.memory_space<vmem>>, vector<1024x64xf32>
    %cst = arith.constant dense<0.000000e+00> : vector<8x64xf32>
    %2 = tpu.matmul %0, %1, %cst {dimension_numbers = #tpu.dot_dimension_numbers<[1], [0], [0], [1], [0, 0, 1, 1], [], []>} : vector<8x1024xf32>, vector<1024x64xf32>, vector<8x64xf32> -> vector<8x64xf32>
    %c0_3 = arith.constant 0 : index
    %c0_4 = arith.constant 0 : index
    %3 = vector.load %arg3[%c0_3, %c0_4] : memref<1x64xf32, #tpu.memory_space<vmem>>, vector<1x64xf32>
    %4 = vector.broadcast %3 : vector<1x64xf32> to vector<8x64xf32>
    %5 = arith.addf %2, %4 : vector<8x64xf32>
    %6 = vector.extract_strided_slice %5 {offsets = [0, 0], sizes = [8, 32], strides = [1, 1]} : vector<8x64xf32> to vector<8x32xf32>
    %7 = vector.extract_strided_slice %5 {offsets = [0, 32], sizes = [8, 32], strides = [1, 1]} : vector<8x64xf32> to vector<8x32xf32>
    %cst_5 = arith.constant 5.000000e-01 : f32
    %8 = vector.broadcast %cst_5 : f32 to vector<8x32xf32>
    %9 = arith.mulf %8, %7 : vector<8x32xf32>
    %10 = math.exp %9 : vector<8x32xf32>
    %c0_6 = arith.constant 0 : index
    %c0_7 = arith.constant 0 : index
    %11 = vector.load %arg4[%c0_6, %c0_7] : memref<8x32xf32, #tpu.memory_space<vmem>>, vector<8x32xf32>
    %12 = arith.mulf %10, %11 : vector<8x32xf32>
    %13 = arith.addf %6, %12 : vector<8x32xf32>
    %14 = arith.mulf %11, %11 : vector<8x32xf32>
    %cst_8 = arith.constant -5.000000e-01 : f32
    %15 = vector.broadcast %cst_8 : f32 to vector<8x32xf32>
    %16 = arith.mulf %15, %14 : vector<8x32xf32>
    %cst_9 = arith.constant 5.000000e-01 : f32
    %17 = vector.broadcast %cst_9 : f32 to vector<8x32xf32>
    %18 = arith.mulf %17, %7 : vector<8x32xf32>
    %19 = arith.subf %16, %18 : vector<8x32xf32>
    %cst_10 = arith.constant 0.918938517 : f32
    %20 = vector.broadcast %cst_10 : f32 to vector<8x32xf32>
    %21 = arith.subf %19, %20 : vector<8x32xf32>
    %22 = arith.mulf %13, %13 : vector<8x32xf32>
    %cst_11 = arith.constant -5.000000e-01 : f32
    %23 = vector.broadcast %cst_11 : f32 to vector<8x32xf32>
    %24 = arith.mulf %23, %22 : vector<8x32xf32>
    %cst_12 = arith.constant 0.918938517 : f32
    %25 = vector.broadcast %cst_12 : f32 to vector<8x32xf32>
    %26 = arith.subf %24, %25 : vector<8x32xf32>
    %27 = arith.mulf %10, %10 : vector<8x32xf32>
    %cst_13 = arith.constant -5.000000e-01 : f32
    %28 = vector.broadcast %cst_13 : f32 to vector<8x32xf32>
    %29 = arith.mulf %28, %7 : vector<8x32xf32>
    %30 = arith.mulf %6, %6 : vector<8x32xf32>
    %31 = arith.addf %27, %30 : vector<8x32xf32>
    %cst_14 = arith.constant 5.000000e-01 : f32
    %32 = vector.broadcast %cst_14 : f32 to vector<8x32xf32>
    %33 = arith.mulf %32, %31 : vector<8x32xf32>
    %34 = arith.addf %29, %33 : vector<8x32xf32>
    %cst_15 = arith.constant 5.000000e-01 : f32
    %35 = vector.broadcast %cst_15 : f32 to vector<8x32xf32>
    %36 = arith.subf %34, %35 : vector<8x32xf32>
    %37 = tpu.concatenate %13, %36, %21, %26 in 1 : vector<8x32xf32>, vector<8x32xf32>, vector<8x32xf32>, vector<8x32xf32> -> vector<8x128xf32>
    %c0_16 = arith.constant 0 : index
    %c0_17 = arith.constant 0 : index
    %38 = vector.load %arg5[%c0_16, %c0_17] : memref<8x128xf32, #tpu.memory_space<vmem>>, vector<8x128xf32>
    tpu.vector_store %arg5[%c0_16, %c0_17], %37 {strides = array<i32>} : memref<8x128xf32, #tpu.memory_space<vmem>>, vector<8x128xf32>,
    return
  }
  func.func @transform_0(%arg0: i32) -> (i32, i32) {
    %c0_i32 = arith.constant 0 : i32
    %c0_i32_0 = arith.constant 0 : i32
    return %arg0, %c0_i32 : i32, i32
  }
  func.func @transform_1(%arg0: i32) -> (i32, i32) {
    %c0_i32 = arith.constant 0 : i32
    %c0_i32_0 = arith.constant 0 : i32
    %c0_i32_1 = arith.constant 0 : i32
    return %c0_i32, %c0_i32_0 : i32, i32
  }
  func.func @transform_2(%arg0: i32) -> (i32, i32) {
    %c0_i32 = arith.constant 0 : i32
    %c0_i32_0 = arith.constant 0 : i32
    %c0_i32_1 = arith.constant 0 : i32
    return %c0_i32, %c0_i32_0 : i32, i32
  }
  func.func @transform_3(%arg0: i32) -> (i32, i32) {
    %c0_i32 = arith.constant 0 : i32
    %c0_i32_0 = arith.constant 0 : i32
    return %arg0, %c0_i32 : i32, i32
  }
  func.func @transform_4(%arg0: i32) -> (i32, i32) {
    %c0_i32 = arith.constant 0 : i32
    %c0_i32_0 = arith.constant 0 : i32
    return %arg0, %c0_i32 : i32, i32
  }
}

</mosaic_0001>

<llo_original>
// kernel: gaussian_encoder_forward.1
$region0: #{gaussian_encoder_forward.1}
  #allocation0 [shape = 'u32[]', space=smem, size = 0x4, offset = 0x4, fixed_abs, tag = 'smem constant byte address 0x4 - core index']
  #allocation1 [shape = 'u32[72,128]{1,0:T(1,128)}', space=vmem, size = 0x9000, scoped, tag = 'internal scratch']
  %s0 = inlined_call_operand.vmem [shape: f32[8,1024], index: 0, kind: input, shape index: {}]
  %s1 = inlined_call_operand.vmem [shape: f32[1024,64], index: 1, kind: input, shape index: {}]
  %s2 = inlined_call_operand.vmem [shape: f32[1,64], index: 2, kind: input, shape index: {}]
  %s3 = inlined_call_operand.vmem [shape: f32[8,32], index: 3, kind: input, shape index: {}]
  %s4 = inlined_call_operand.vmem [shape: f32[8,128], index: 4, kind: output, shape index: {}]
  %s5 = sld [smem:[#allocation0]]
  $region26: #{gaussian_encoder_forward.1} parent=0
    _
  %s7 = ssub.s32 1, %s5
  %s8 = scalar_select 0, %s7, %s5
  // Predicated region
  $region2: #{gaussian_encoder_forward.1} parent=0 // pred_check
    _
  $region3: #{gaussian_encoder_forward.1} parent=0 // pred_check_branch
    %10 = sbr.rel (0) target = $region5
  $region4: #{gaussian_encoder_forward.1} parent=0 // pred_region
    _
  $region5: #{gaussian_encoder_forward.1} parent=0 // pred_fallthru
    _
  // Predicated region
  $region6: #{gaussian_encoder_forward.1} parent=0 // pred_check
    _
  $region7: #{gaussian_encoder_forward.1} parent=0 // pred_check_branch
    %12 = sbr.rel (0) target = $region9
  $region8: #{gaussian_encoder_forward.1} parent=0 // pred_region
    _
  $region9: #{gaussian_encoder_forward.1} parent=0 // pred_fallthru
    _
  // Predicated region
  $region10: #{gaussian_encoder_forward.1} parent=0 // pred_check
    _
  $region11: #{gaussian_encoder_forward.1} parent=0 // pred_check_branch
    %14 = sbr.rel (0) target = $region13
  $region12: #{gaussian_encoder_forward.1} parent=0 // pred_region
    _
  $region13: #{gaussian_encoder_forward.1} parent=0 // pred_fallthru
    _
  // Predicated region
  $region14: #{gaussian_encoder_forward.1} parent=0 // pred_check
    _
  $region15: #{gaussian_encoder_forward.1} parent=0 // pred_check_branch
    %16 = sbr.rel (0) target = $region17
  $region16: #{gaussian_encoder_forward.1} parent=0 // pred_region
    _
  $region17: #{gaussian_encoder_forward.1} parent=0 // pred_fallthru
    _
  %v17 = vld [vmem:[%s0] sm:$0xff]
  %v18 = vld [vmem:[%s0 + $0x8] sm:$0xff]
  %v19 = vld [vmem:[%s0 + $0x10] sm:$0xff]
  %v20 = vld [vmem:[%s0 + $0x18] sm:$0xff]
  %v21 = vld [vmem:[%s0 + $0x20] sm:$0xff]
  %v22 = vld [vmem:[%s0 + $0x28] sm:$0xff]
  %v23 = vld [vmem:[%s0 + $0x30] sm:$0xff]
  %v24 = vld [vmem:[%s0 + $0x38] sm:$0xff]
  %v25 = vld [vmem:[%s1] sm:$0xff]
  %v26 = vld [vmem:[%s1 + $0x8] sm:$0xff]
  %v27 = vld [vmem:[%s1 + $0x10] sm:$0xff]
  %v28 = vld [vmem:[%s1 + $0x18] sm:$0xff]
  %v29 = vld [vmem:[%s1 + $0x20] sm:$0xff]
  %v30 = vld [vmem:[%s1 + $0x28] sm:$0xff]
  %v31 = vld [vmem:[%s1 + $0x30] sm:$0xff]
  %v32 = vld [vmem:[%s1 + $0x38] sm:$0xff]
  %v33 = vld [vmem:[%s1 + $0x40] sm:$0xff]
  %v34 = vld [vmem:[%s1 + $0x48] sm:$0xff]
  %v35 = vld [vmem:[%s1 + $0x50] sm:$0xff]
  %v36 = vld [vmem:[%s1 + $0x58] sm:$0xff]
  %v37 = vld [vmem:[%s1 + $0x60] sm:$0xff]
  %v38 = vld [vmem:[%s1 + $0x68] sm:$0xff]
  %v39 = vld [vmem:[%s1 + $0x70] sm:$0xff]
  %v40 = vld [vmem:[%s1 + $0x78] sm:$0xff]
  %v41 = vld [vmem:[%s1 + $0x80] sm:$0xff]
  %v42 = vld [vmem:[%s1 + $0x88] sm:$0xff]
  %v43 = vld [vmem:[%s1 + $0x90] sm:$0xff]
  %v44 = vld [vmem:[%s1 + $0x98] sm:$0xff]
  %v45 = vld [vmem:[%s1 + $0xa0] sm:$0xff]
  %v46 = vld [vmem:[%s1 + $0xa8] sm:$0xff]
  %v47 = vld [vmem:[%s1 + $0xb0] sm:$0xff]
  %v48 = vld [vmem:[%s1 + $0xb8] sm:$0xff]
  %v49 = vld [vmem:[%s1 + $0xc0] sm:$0xff]
  %v50 = vld [vmem:[%s1 + $0xc8] sm:$0xff]
  %v51 = vld [vmem:[%s1 + $0xd0] sm:$0xff]
  %v52 = vld [vmem:[%s1 + $0xd8] sm:$0xff]
  %v53 = vld [vmem:[%s1 + $0xe0] sm:$0xff]
  %v54 = vld [vmem:[%s1 + $0xe8] sm:$0xff]
  %v55 = vld [vmem:[%s1 + $0xf0] sm:$0xff]
  %v56 = vld [vmem:[%s1 + $0xf8] sm:$0xff]
  %v57 = vld [vmem:[%s1 + $0x100] sm:$0xff]
  %v58 = vld [vmem:[%s1 + $0x108] sm:$0xff]
  %v59 = vld [vmem:[%s1 + $0x110] sm:$0xff]
  %v60 = vld [vmem:[%s1 + $0x118] sm:$0xff]
  %v61 = vld [vmem:[%s1 + $0x120] sm:$0xff]
  %v62 = vld [vmem:[%s1 + $0x128] sm:$0xff]
  %v63 = vld [vmem:[%s1 + $0x130] sm:$0xff]
  %v64 = vld [vmem:[%s1 + $0x138] sm:$0xff]
  %v65 = vld [vmem:[%s1 + $0x140] sm:$0xff]
  %v66 = vld [vmem:[%s1 + $0x148] sm:$0xff]
  %v67 = vld [vmem:[%s1 + $0x150] sm:$0xff]
  %v68 = vld [vmem:[%s1 + $0x158] sm:$0xff]
  %v69 = vld [vmem:[%s1 + $0x160] sm:$0xff]
  %v70 = vld [vmem:[%s1 + $0x168] sm:$0xff]
  %v71 = vld [vmem:[%s1 + $0x170] sm:$0xff]
  %v72 = vld [vmem:[%s1 + $0x178] sm:$0xff]
  %v73 = vld [vmem:[%s1 + $0x180] sm:$0xff]
  %v74 = vld [vmem:[%s1 + $0x188] sm:$0xff]
  %v75 = vld [vmem:[%s1 + $0x190] sm:$0xff]
  %v76 = vld [vmem:[%s1 + $0x198] sm:$0xff]
  %v77 = vld [vmem:[%s1 + $0x1a0] sm:$0xff]
  %v78 = vld [vmem:[%s1 + $0x1a8] sm:$0xff]
  %v79 = vld [vmem:[%s1 + $0x1b0] sm:$0xff]
  %v80 = vld [vmem:[%s1 + $0x1b8] sm:$0xff]
  %v81 = vld [vmem:[%s1 + $0x1c0] sm:$0xff]
  %v82 = vld [vmem:[%s1 + $0x1c8] sm:$0xff]
  %v83 = vld [vmem:[%s1 + $0x1d0] sm:$0xff]
  %v84 = vld [vmem:[%s1 + $0x1d8] sm:$0xff]
  %v85 = vld [vmem:[%s1 + $0x1e0] sm:$0xff]
  %v86 = vld [vmem:[%s1 + $0x1e8] sm:$0xff]
  %v87 = vld [vmem:[%s1 + $0x1f0] sm:$0xff]
  %v88 = vld [vmem:[%s1 + $0x1f8] sm:$0xff]
  %v89 = vld [vmem:[%s1 + $0x200] sm:$0xff]
  %v90 = vld [vmem:[%s1 + $0x208] sm:$0xff]
  %v91 = vld [vmem:[%s1 + $0x210] sm:$0xff]
  %v92 = vld [vmem:[%s1 + $0x218] sm:$0xff]
  %v93 = vld [vmem:[%s1 + $0x220] sm:$0xff]
  %v94 = vld [vmem:[%s1 + $0x228] sm:$0xff]
  %v95 = vld [vmem:[%s1 + $0x230] sm:$0xff]
  %v96 = vld [vmem:[%s1 + $0x238] sm:$0xff]
  %v97 = vld [vmem:[%s1 + $0x240] sm:$0xff]
  %v98 = vld [vmem:[%s1 + $0x248] sm:$0xff]
  %v99 = vld [vmem:[%s1 + $0x250] sm:$0xff]
  %v100 = vld [vmem:[%s1 + $0x258] sm:$0xff]
  %v101 = vld [vmem:[%s1 + $0x260] sm:$0xff]
  %v102 = vld [vmem:[%s1 + $0x268] sm:$0xff]
  %v103 = vld [vmem:[%s1 + $0x270] sm:$0xff]
  %v104 = vld [vmem:[%s1 + $0x278] sm:$0xff]
  %v105 = vld [vmem:[%s1 + $0x280] sm:$0xff]
  %v106 = vld [vmem:[%s1 + $0x288] sm:$0xff]
  %v107 = vld [vmem:[%s1 + $0x290] sm:$0xff]
  %v108 = vld [vmem:[%s1 + $0x298] sm:$0xff]
  %v109 = vld [vmem:[%s1 + $0x2a0] sm:$0xff]
  %v110 = vld [vmem:[%s1 + $0x2a8] sm:$0xff]
  %v111 = vld [vmem:[%s1 + $0x2b0] sm:$0xff]
  %v112 = vld [vmem:[%s1 + $0x2b8] sm:$0xff]
  %v113 = vld [vmem:[%s1 + $0x2c0] sm:$0xff]
  %v114 = vld [vmem:[%s1 + $0x2c8] sm:$0xff]
  %v115 = vld [vmem:[%s1 + $0x2d0] sm:$0xff]
  %v116 = vld [vmem:[%s1 + $0x2d8] sm:$0xff]
  %v117 = vld [vmem:[%s1 + $0x2e0] sm:$0xff]
  %v118 = vld [vmem:[%s1 + $0x2e8] sm:$0xff]
  %v119 = vld [vmem:[%s1 + $0x2f0] sm:$0xff]
  %v120 = vld [vmem:[%s1 + $0x2f8] sm:$0xff]
  %v121 = vld [vmem:[%s1 + $0x300] sm:$0xff]
  %v122 = vld [vmem:[%s1 + $0x308] sm:$0xff]
  %v123 = vld [vmem:[%s1 + $0x310] sm:$0xff]
  %v124 = vld [vmem:[%s1 + $0x318] sm:$0xff]
  %v125 = vld [vmem:[%s1 + $0x320] sm:$0xff]
  %v126 = vld [vmem:[%s1 + $0x328] sm:$0xff]
  %v127 = vld [vmem:[%s1 + $0x330] sm:$0xff]
  %v128 = vld [vmem:[%s1 + $0x338] sm:$0xff]
  %v129 = vld [vmem:[%s1 + $0x340] sm:$0xff]
  %v130 = vld [vmem:[%s1 + $0x348] sm:$0xff]
  %v131 = vld [vmem:[%s1 + $0x350] sm:$0xff]
  %v132 = vld [vmem:[%s1 + $0x358] sm:$0xff]
  %v133 = vld [vmem:[%s1 + $0x360] sm:$0xff]
  %v134 = vld [vmem:[%s1 + $0x368] sm:$0xff]
  %v135 = vld [vmem:[%s1 + $0x370] sm:$0xff]
  %v136 = vld [vmem:[%s1 + $0x378] sm:$0xff]
  %v137 = vld [vmem:[%s1 + $0x380] sm:$0xff]
  %v138 = vld [vmem:[%s1 + $0x388] sm:$0xff]
  %v139 = vld [vmem:[%s1 + $0x390] sm:$0xff]
  %v140 = vld [vmem:[%s1 + $0x398] sm:$0xff]
  %v141 = vld [vmem:[%s1 + $0x3a0] sm:$0xff]
  %v142 = vld [vmem:[%s1 + $0x3a8] sm:$0xff]
  %v143 = vld [vmem:[%s1 + $0x3b0] sm:$0xff]
  %v144 = vld [vmem:[%s1 + $0x3b8] sm:$0xff]
  %v145 = vld [vmem:[%s1 + $0x3c0] sm:$0xff]
  %v146 = vld [vmem:[%s1 + $0x3c8] sm:$0xff]
  %v147 = vld [vmem:[%s1 + $0x3d0] sm:$0xff]
  %v148 = vld [vmem:[%s1 + $0x3d8] sm:$0xff]
  %v149 = vld [vmem:[%s1 + $0x3e0] sm:$0xff]
  %v150 = vld [vmem:[%s1 + $0x3e8] sm:$0xff]
  %v151 = vld [vmem:[%s1 + $0x3f0] sm:$0xff]
  %v152 = vld [vmem:[%s1 + $0x3f8] sm:$0xff]
  %v153 = vld [vmem:[%s2] sm:$0x1]
  %v155 = vperm.slane %v153, 0
  %157 = vmatpush.msra.mxu0 %v40
  %158 = vmatpush.msra.mxu0 %v39
  %159 = vmatpush.msra.mxu0 %v38
  %160 = vmatpush.msra.mxu0 %v37
  %161 = vmatpush.msra.mxu0 %v36
  %162 = vmatpush.msra.mxu0 %v35
  %163 = vmatpush.msra.mxu0 %v34
  %164 = vmatpush.msra.mxu0 %v33
  %165 = vmatpush.msra.mxu0 %v32
  %166 = vmatpush.msra.mxu0 %v31
  %167 = vmatpush.msra.mxu0 %v30
  %168 = vmatpush.msra.mxu0 %v29
  %169 = vmatpush.msra.mxu0 %v28
  %170 = vmatpush.msra.mxu0 %v27
  %171 = vmatpush.msra.mxu0 %v26
  %172 = vmatpush.msra.mxu0 %v25
  %173 = vmatmul.f32.gmra.mxu0 %v17
  %v174 = vpop.f32.mrf.mxu0
  %v175 = vadd.f32 %v155, %v174
  %176 = vdwg.mxu0
  %177 = vmatpush.msra.mxu0 %v56
  %178 = vmatpush.msra.mxu0 %v55
  %179 = vmatpush.msra.mxu0 %v54
  %180 = vmatpush.msra.mxu0 %v53
  %181 = vmatpush.msra.mxu0 %v52
  %182 = vmatpush.msra.mxu0 %v51
  %183 = vmatpush.msra.mxu0 %v50
  %184 = vmatpush.msra.mxu0 %v49
  %185 = vmatpush.msra.mxu0 %v48
  %186 = vmatpush.msra.mxu0 %v47
  %187 = vmatpush.msra.mxu0 %v46
  %188 = vmatpush.msra.mxu0 %v45
  %189 = vmatpush.msra.mxu0 %v44
  %190 = vmatpush.msra.mxu0 %v43
  %191 = vmatpush.msra.mxu0 %v42
  %192 = vmatpush.msra.mxu0 %v41
  %193 = vmatmul.f32.gmra.mxu0 %v18
  %v194 = vpop.f32.mrf.mxu0
  %v195 = vadd.f32 %v175, %v194
  %196 = vdwg.mxu0
  %197 = vmatpush.msra.mxu0 %v72
  %198 = vmatpush.msra.mxu0 %v71
  %199 = vmatpush.msra.mxu0 %v70
  %200 = vmatpush.msra.mxu0 %v69
  %201 = vmatpush.msra.mxu0 %v68
  %202 = vmatpush.msra.mxu0 %v67
  %203 = vmatpush.msra.mxu0 %v66
  %204 = vmatpush.msra.mxu0 %v65
  %205 = vmatpush.msra.mxu0 %v64
  %206 = vmatpush.msra.mxu0 %v63
  %207 = vmatpush.msra.mxu0 %v62
  %208 = vmatpush.msra.mxu0 %v61
  %209 = vmatpush.msra.mxu0 %v60
  %210 = vmatpush.msra.mxu0 %v59
  %211 = vmatpush.msra.mxu0 %v58
  %212 = vmatpush.msra.mxu0 %v57
  %213 = vmatmul.f32.gmra.mxu0 %v19
  %v214 = vpop.f32.mrf.mxu0
  %v215 = vadd.f32 %v195, %v214
  %216 = vdwg.mxu0
  %217 = vmatpush.msra.mxu0 %v88
  %218 = vmatpush.msra.mxu0 %v87
  %219 = vmatpush.msra.mxu0 %v86
  %220 = vmatpush.msra.mxu0 %v85
  %221 = vmatpush.msra.mxu0 %v84
  %222 = vmatpush.msra.mxu0 %v83
  %223 = vmatpush.msra.mxu0 %v82
  %224 = vmatpush.msra.mxu0 %v81
  %225 = vmatpush.msra.mxu0 %v80
  %226 = vmatpush.msra.mxu0 %v79
  %227 = vmatpush.msra.mxu0 %v78
  %228 = vmatpush.msra.mxu0 %v77
  %229 = vmatpush.msra.mxu0 %v76
  %230 = vmatpush.msra.mxu0 %v75
  %231 = vmatpush.msra.mxu0 %v74
  %232 = vmatpush.msra.mxu0 %v73
  %233 = vmatmul.f32.gmra.mxu0 %v20
  %v234 = vpop.f32.mrf.mxu0
  %v235 = vadd.f32 %v215, %v234
  %236 = vdwg.mxu0
  %237 = vmatpush.msra.mxu0 %v104
  %238 = vmatpush.msra.mxu0 %v103
  %239 = vmatpush.msra.mxu0 %v102
  %240 = vmatpush.msra.mxu0 %v101
  %241 = vmatpush.msra.mxu0 %v100
  %242 = vmatpush.msra.mxu0 %v99
  %243 = vmatpush.msra.mxu0 %v98
  %244 = vmatpush.msra.mxu0 %v97
  %245 = vmatpush.msra.mxu0 %v96
  %246 = vmatpush.msra.mxu0 %v95
  %247 = vmatpush.msra.mxu0 %v94
  %248 = vmatpush.msra.mxu0 %v93
  %249 = vmatpush.msra.mxu0 %v92
  %250 = vmatpush.msra.mxu0 %v91
  %251 = vmatpush.msra.mxu0 %v90
  %252 = vmatpush.msra.mxu0 %v89
  %253 = vmatmul.f32.gmra.mxu0 %v21
  %v254 = vpop.f32.mrf.mxu0
  %v255 = vadd.f32 %v235, %v254
  %256 = vdwg.mxu0
  %257 = vmatpush.msra.mxu0 %v120
  %258 = vmatpush.msra.mxu0 %v119
  %259 = vmatpush.msra.mxu0 %v118
  %260 = vmatpush.msra.mxu0 %v117
  %261 = vmatpush.msra.mxu0 %v116
  %262 = vmatpush.msra.mxu0 %v115
  %263 = vmatpush.msra.mxu0 %v114
  %264 = vmatpush.msra.mxu0 %v113
  %265 = vmatpush.msra.mxu0 %v112
  %266 = vmatpush.msra.mxu0 %v111
  %267 = vmatpush.msra.mxu0 %v110
  %268 = vmatpush.msra.mxu0 %v109
  %269 = vmatpush.msra.mxu0 %v108
  %270 = vmatpush.msra.mxu0 %v107
  %271 = vmatpush.msra.mxu0 %v106
  %272 = vmatpush.msra.mxu0 %v105
  %273 = vmatmul.f32.gmra.mxu0 %v22
  %v274 = vpop.f32.mrf.mxu0
  %v275 = vadd.f32 %v255, %v274
  %276 = vdwg.mxu0
  %277 = vmatpush.msra.mxu0 %v136
  %278 = vmatpush.msra.mxu0 %v135
  %279 = vmatpush.msra.mxu0 %v134
  %280 = vmatpush.msra.mxu0 %v133
  %281 = vmatpush.msra.mxu0 %v132
  %282 = vmatpush.msra.mxu0 %v131
  %283 = vmatpush.msra.mxu0 %v130
  %284 = vmatpush.msra.mxu0 %v129
  %285 = vmatpush.msra.mxu0 %v128
  %286 = vmatpush.msra.mxu0 %v127
  %287 = vmatpush.msra.mxu0 %v126
  %288 = vmatpush.msra.mxu0 %v125
  %289 = vmatpush.msra.mxu0 %v124
  %290 = vmatpush.msra.mxu0 %v123
  %291 = vmatpush.msra.mxu0 %v122
  %292 = vmatpush.msra.mxu0 %v121
  %293 = vmatmul.f32.gmra.mxu0 %v23
  %v294 = vpop.f32.mrf.mxu0
  %v295 = vadd.f32 %v275, %v294
  %296 = vdwg.mxu0
  %297 = vmatpush.msra.mxu0 %v152
  %298 = vmatpush.msra.mxu0 %v151
  %299 = vmatpush.msra.mxu0 %v150
  %300 = vmatpush.msra.mxu0 %v149
  %301 = vmatpush.msra.mxu0 %v148
  %302 = vmatpush.msra.mxu0 %v147
  %303 = vmatpush.msra.mxu0 %v146
  %304 = vmatpush.msra.mxu0 %v145
  %305 = vmatpush.msra.mxu0 %v144
  %306 = vmatpush.msra.mxu0 %v143
  %307 = vmatpush.msra.mxu0 %v142
  %308 = vmatpush.msra.mxu0 %v141
  %309 = vmatpush.msra.mxu0 %v140
  %310 = vmatpush.msra.mxu0 %v139
  %311 = vmatpush.msra.mxu0 %v138
  %312 = vmatpush.msra.mxu0 %v137
  %313 = vmatmul.f32.gmra.mxu0 %v24
  %v314 = vpop.f32.mrf.mxu0
  %v315 = vadd.f32 %v295, %v314
  %316 = vdwg.mxu0
  %v317 = vmul.f32 %v315, 0.5
  %v318 = vmul.f32 %v317, 1.442695
  %v319 = vpow.pop %v318
  %v320 = vld [vmem:[%s3] sm:$0xff]
  %322 = vrot.lane.b32.xlu0 %v320, 32
  %v323 = vpop.permute.xlu0 %322
  %v325 = vmul.f32 %v319, %v323
  %327 = vrot.lane.b32.xlu0 %v325, 96
  %v328 = vpop.permute.xlu0 %327
  %v330 = vadd.f32 %v315, %v328
  %v331 = vmul.f32 %v320, %v320
  %v332 = vmul.f32 %v331, -0.5
  %334 = vrot.lane.b32.xlu0 %v317, 96
  %v335 = vpop.permute.xlu0 %334
  %v337 = vsub.f32 %v332, %v335
  %v338 = vsub.f32 %v337, 0.9189385
  %v339 = vmul.f32 %v330, %v330
  %v340 = vmul.f32 %v339, -0.5
  %v341 = vsub.f32 %v340, 0.9189385
  %v342 = vmul.f32 %v319, %v319
  %v343 = vmul.f32 %v315, -0.5
  %v344 = vmul.f32 %v315, %v315
  %346 = vrot.lane.b32.xlu0 %v344, 32
  %v347 = vpop.permute.xlu0 %346
  %v349 = vadd.f32 %v342, %v347
  %v350 = vmul.f32 %v349, 0.5
  %v351 = vadd.f32 %v343, %v350
  %v352 = vsub.f32 %v351, 0.5
  %354 = vrot.lane.b32.xlu0 %v338, 64
  %v355 = vpop.permute.xlu0 %354
  %358 = vrot.lane.b32.xlu0 %v341, 96
  %v359 = vpop.permute.xlu0 %358
  %vm361 = vcmask 261120
  %v362 = vsel %vm361, %v330, %v352
  %vm363 = vcmask 523264
  %v364 = vsel %vm363, %v362, %v355
  %vm365 = vcmask 785408
  %v366 = vsel %vm365, %v364, %v359
  %367 = vst [vmem:[%s4] sm:$0xff] %v366
  // Predicated region
  $region18: #{gaussian_encoder_forward.1} parent=0 // pred_check
    _
  $region19: #{gaussian_encoder_forward.1} parent=0 // pred_check_branch
    %369 = sbr.rel (0) target = $region21
  $region20: #{gaussian_encoder_forward.1} parent=0 // pred_region
    _
  $region21: #{gaussian_encoder_forward.1} parent=0 // pred_fallthru
    _
  // Predicated region
  $region22: #{gaussian_encoder_forward.1} parent=0 // pred_check
    _
  $region23: #{gaussian_encoder_forward.1} parent=0 // pred_check_branch
    %371 = sbr.rel (0) target = $region25
  $region24: #{gaussian_encoder_forward.1} parent=0 // pred_region
    _
  $region25: #{gaussian_encoder_forward.1} parent=0 // pred_fallthru
    _

</llo_original>
